<compile_context>
chip_gen: v5e
topology: v5e:2x2
jax: 0.10.0
libtpu: 0.0.40
codegen_flags: <defaults>
</compile_context>

<pallas_src>
import functools
import math

import jax
import jax.numpy as jnp
from jax.experimental import pallas as pl
from jax.experimental.pallas import tpu as pltpu


def _round_up(x, m):
    return (x + m - 1) // m * m


def _sinusoidal_kernel(x_ref, s_ref, w_ref, o_ref, *, k_half):
    # x_ref: (tm, 3)         row block of flattened (x, y, z) coords
    # s_ref: (3, 2*k_pad)    inv-scale, block-diagonal, duplicated [sin|cos]
    # w_ref: (2*k_pad, out)  merged pre-permuted [sin-rows | cos-rows] weight
    # o_ref: (tm, out)
    x = x_ref[...]
    s = s_ref[...]
    # arg[:, h*k_pad + c*d6 + k] = x[:, c] / scale[k]   (h = 0 sin-half, 1 cos-half)
    # Exact f32 broadcast-multiplies; padded lanes stay exactly 0.
    arg = (x[:, 0:1] * s[0:1, :]
           + x[:, 1:2] * s[1:2, :]
           + x[:, 2:3] * s[2:3, :])                       # (tm, 2*k_pad)
    lane = jax.lax.broadcasted_iota(jnp.int32, arg.shape, 1)
    trig = jnp.where(lane < k_half, jnp.sin(arg), jnp.cos(arg))
    # Single MXU contraction, f32 accumulation.  Zero-padded weight rows make
    # the padded lanes (where cos(0)=1) contribute nothing.
    o_ref[...] = jnp.dot(trig, w_ref[...],
                         preferred_element_type=jnp.float32).astype(o_ref.dtype)


class SinusoidalEmbedding3DPallas:
    def __init__(self, out_dim, key):
        self.out_dim = out_dim
        if out_dim % 6:
            self.intermediate_dim = int(math.ceil(out_dim / 6) * 6)
        else:
            self.intermediate_dim = out_dim
        d6 = self.intermediate_dim // 6
        self.d6 = d6

        # scaling_factor[k] = (10000 ** (1/intermediate_dim)) ** (6*k)
        base = jnp.float32(10000.0) ** jnp.float32(1.0 / self.intermediate_dim)
        self.scaling_factor = (
            jnp.ones((d6,), jnp.float32) * base
        ) ** (jnp.arange(d6, dtype=jnp.float32) * 6.0)            # (d6,)
        inv_scale = 1.0 / self.scaling_factor                     # (d6,)

        # nn.Linear(intermediate_dim, out_dim, bias=False) weight (out, in),
        # PyTorch-style uniform(-1/sqrt(in), 1/sqrt(in)) init (deterministic).
        bound = 1.0 / math.sqrt(self.intermediate_dim)
        self.weight = jax.random.uniform(
            key, (out_dim, self.intermediate_dim), jnp.float32,
            minval=-bound, maxval=bound,
        )

        self.k_core = 3 * d6                      # = intermediate_dim / 2
        self.k_pad = _round_up(self.k_core, 8)    # sublane-aligned half width
        self.k2 = 2 * self.k_pad                  # [sin-half | cos-half]

        # Merged pre-permuted weight: rows [0, k_core) are the sin weights
        # (coord-major, then freq); rows [k_pad, k_pad+k_core) are the cos
        # weights.  Padding rows are zero.  torch column of (coord c, freq k):
        #   sin -> c*2*d6 + 2*k,   cos -> c*2*d6 + 2*k + 1.
        w_t = self.weight.T                       # (6*d6, out_dim)
        sin_idx = jnp.array(
            [c * 2 * d6 + 2 * k for c in range(3) for k in range(d6)],
            dtype=jnp.int32)
        w_merged = jnp.zeros((self.k2, out_dim), jnp.float32)
        w_merged = w_merged.at[0:self.k_core].set(w_t[sin_idx])
        w_merged = w_merged.at[self.k_pad:self.k_pad + self.k_core].set(
            w_t[sin_idx + 1])
        self.w_merged = w_merged

        # S[c, h*k_pad + c*d6 + k] = inv_scale[k] for h in {0, 1}; 0 elsewhere.
        s_mat = jnp.zeros((3, self.k2), jnp.float32)
        for c in range(3):
            s_mat = s_mat.at[c, c * d6:c * d6 + d6].set(inv_scale)
            s_mat = s_mat.at[c, self.k_pad + c * d6:
                             self.k_pad + c * d6 + d6].set(inv_scale)
        self.s_mat = s_mat

    def _pick_tm(self, M, tm):
        tm = max(8, _round_up(tm, 8))
        # Keep the double-buffered output block around <= 4 MiB.
        rows_cap = max(256, (4 * 1024 * 1024) // (8 * max(self.out_dim, 128)))
        tm = min(tm, _round_up(rows_cap, 8))
        tm_eff = min(tm, _round_up(M, 8))
        # v7x has 2 TensorCores on the "parallel" axis: keep >= 2 grid steps
        # whenever there is enough work to be worth splitting.
        if M >= 1024:
            tm_eff = min(tm_eff, max(8, _round_up(pl.cdiv(M, 2), 8)))
        return max(8, tm_eff)

    def __call__(self, x, tm=2048, out_dtype=jnp.float32):
        B, N, three = x.shape
        assert three == 3
        M = B * N
        x_flat = x.reshape(M, 3).astype(jnp.float32)

        tm_eff = self._pick_tm(M, tm)
        grid_m = pl.cdiv(M, tm_eff)

        out_itemsize = jnp.dtype(out_dtype).itemsize
        cost = pl.CostEstimate(
            flops=2 * M * self.k2 * self.out_dim + 8 * M * self.k2,
            transcendentals=2 * M * self.k2,
            bytes_accessed=(M * 3 * 4
                            + M * self.out_dim * out_itemsize
                            + (self.w_merged.size + self.s_mat.size) * 4),
        )

        # VMEM hygiene: only raise the scoped limit when resident blocks are
        # big (large out_dim); defaults are plenty for small out_dim.
        n_vmem = _round_up(self.out_dim, 128)
        k_vmem = _round_up(self.k2, 128)
        vmem_est = (2 * tm_eff * 512                        # x (lane padded)
                    + 2 * 8 * k_vmem * 4                    # s_mat
                    + 2 * self.k2 * n_vmem * 4              # merged weight
                    + 2 * tm_eff * n_vmem * out_itemsize    # output
                    + 2 * tm_eff * k_vmem * 4)              # arg/trig temps
        cp_kwargs = dict(dimension_semantics=("parallel",))
        if vmem_est > 12 * 1024 * 1024:
            cp_kwargs["vmem_limit_bytes"] = min(int(vmem_est) + (4 << 20),
                                                100 << 20)
        # TODO(synk): for very large out_dim, add a trailing "arbitrary" grid
        # axis over out_dim tiles (weights (i,j)->(0,j)), cache sin/cos in VMEM
        # scratch under @pl.when(j==0), and single-buffer the constant weights
        # to bound resident VMEM (v7x 64 MiB / v5e 16 MiB scoped).

        out = pl.pallas_call(
            functools.partial(_sinusoidal_kernel, k_half=self.k_pad),
            out_shape=jax.ShapeDtypeStruct((M, self.out_dim), out_dtype),
            grid_spec=pltpu.PrefetchScalarGridSpec(
                num_scalar_prefetch=0,
                grid=(grid_m,),
                in_specs=[
                    pl.BlockSpec((tm_eff, 3), lambda i: (i, 0)),
                    pl.BlockSpec((3, self.k2), lambda i: (0, 0)),
                    pl.BlockSpec((self.k2, self.out_dim), lambda i: (0, 0)),
                ],
                out_specs=pl.BlockSpec((tm_eff, self.out_dim),
                                       lambda i: (i, 0)),
            ),
            compiler_params=pltpu.CompilerParams(**cp_kwargs),
            cost_estimate=cost,
        )(x_flat, self.s_mat, self.w_merged)

        return out.reshape(B, N, self.out_dim)


def reference(module, x):
    """Pure-JAX reference matching the PyTorch forward exactly."""
    B, N, _ = x.shape
    scale = module.scaling_factor.reshape(1, 1, 1, -1)
    arg = x[..., None] / scale                      # (B, N, 3, d6)
    sin_x, cos_x = jnp.sin(arg), jnp.cos(arg)
    pe = jnp.stack([sin_x, cos_x], axis=-1).reshape(B, N,
                                                    module.intermediate_dim)
    return pe @ module.weight.T                     # (B, N, out_dim)


if __name__ == "__main__":
    key = jax.random.PRNGKey(0)
    k_w, k_x1, k_x2 = jax.random.split(key, 3)

    out_dim = 32
    module = SinusoidalEmbedding3DPallas(out_dim, k_w)

    # Small shape: single (small) tile, narrow (out_dim < 128) lane store.
    x_small = jax.random.normal(k_x1, (2, 8, 3), jnp.float32) * 3.0
    y_small = jax.block_until_ready(module(x_small))
    y_small_ref = reference(module, x_small)
    assert y_small.shape == (2, 8, out_dim), y_small.shape
    err_small = float(jnp.max(jnp.abs(y_small - y_small_ref)))
    assert jnp.allclose(y_small, y_small_ref, atol=1e-4, rtol=1e-4), err_small

    # Shape exercising a multi-step grid (v7x >=2-step cap) with unpadded M.
    x_big = jax.random.normal(k_x2, (2, 600, 3), jnp.float32) * 3.0
    y_big = jax.block_until_ready(module(x_big))
    y_big_ref = reference(module, x_big)
    assert y_big.shape == (2, 600, out_dim), y_big.shape
    err_big = float(jnp.max(jnp.abs(y_big - y_big_ref)))
    assert jnp.allclose(y_big, y_big_ref, atol=1e-4, rtol=1e-4), err_big

    print("KERNEL_OK")
</pallas_src>

<mosaic_0001>
module attributes {stable_mosaic.version = 11 : i64} {
  func.func @_sinusoidal_kernel(%arg0: i32, %arg1: memref<16x3xf32, #tpu.memory_space<vmem>>, %arg2: memref<3x48xf32, #tpu.memory_space<vmem>>, %arg3: memref<48x32xf32, #tpu.memory_space<vmem>>, %arg4: memref<16x32xf32, #tpu.memory_space<vmem>>) attributes {dimension_semantics = [#tpu.dimension_semantics<parallel>], iteration_bounds = array<i64: 1>, scalar_prefetch = 0 : i64, scratch_operands = 0 : i64, tpu.core_type = #tpu.core_type<tc>, window_params = [{transform_indices = @transform_0, window_bounds = array<i64: 16, 3>}, {pipeline_mode = #tpu.pipeline_mode<synchronous>, transform_indices = @transform_1, window_bounds = array<i64: 3, 48>}, {pipeline_mode = #tpu.pipeline_mode<synchronous>, transform_indices = @transform_2, window_bounds = array<i64: 48, 32>}, {transform_indices = @transform_3, window_bounds = array<i64: 16, 32>}]} {
    %c0 = arith.constant 0 : index
    %c0_0 = arith.constant 0 : index
    %0 = vector.load %arg1[%c0, %c0_0] : memref<16x3xf32, #tpu.memory_space<vmem>>, vector<16x3xf32>
    %c0_1 = arith.constant 0 : index
    %c0_2 = arith.constant 0 : index
    %1 = vector.load %arg2[%c0_1, %c0_2] : memref<3x48xf32, #tpu.memory_space<vmem>>, vector<3x48xf32>
    %2 = vector.extract_strided_slice %0 {offsets = [0, 0], sizes = [16, 1], strides = [1, 1]} : vector<16x3xf32> to vector<16x1xf32>
    %3 = vector.extract_strided_slice %1 {offsets = [0, 0], sizes = [1, 48], strides = [1, 1]} : vector<3x48xf32> to vector<1x48xf32>
    %4 = vector.broadcast %2 : vector<16x1xf32> to vector<16x48xf32>
    %5 = vector.broadcast %3 : vector<1x48xf32> to vector<16x48xf32>
    %6 = arith.mulf %4, %5 : vector<16x48xf32>
    %7 = vector.extract_strided_slice %0 {offsets = [0, 1], sizes = [16, 1], strides = [1, 1]} : vector<16x3xf32> to vector<16x1xf32>
    %8 = vector.extract_strided_slice %1 {offsets = [1, 0], sizes = [1, 48], strides = [1, 1]} : vector<3x48xf32> to vector<1x48xf32>
    %9 = vector.broadcast %7 : vector<16x1xf32> to vector<16x48xf32>
    %10 = vector.broadcast %8 : vector<1x48xf32> to vector<16x48xf32>
    %11 = arith.mulf %9, %10 : vector<16x48xf32>
    %12 = arith.addf %6, %11 : vector<16x48xf32>
    %13 = vector.extract_strided_slice %0 {offsets = [0, 2], sizes = [16, 1], strides = [1, 1]} : vector<16x3xf32> to vector<16x1xf32>
    %14 = vector.extract_strided_slice %1 {offsets = [2, 0], sizes = [1, 48], strides = [1, 1]} : vector<3x48xf32> to vector<1x48xf32>
    %15 = vector.broadcast %13 : vector<16x1xf32> to vector<16x48xf32>
    %16 = vector.broadcast %14 : vector<1x48xf32> to vector<16x48xf32>
    %17 = arith.mulf %15, %16 : vector<16x48xf32>
    %18 = arith.addf %12, %17 : vector<16x48xf32>
    %19 = tpu.iota {dimensions = array<i32: 1>} : vector<16x48xi32>
    %c24_i32 = arith.constant 24 : i32
    %20 = vector.broadcast %c24_i32 : i32 to vector<16x48xi32>
    %21 = arith.cmpi slt, %19, %20 : vector<16x48xi32>
    %22 = math.sin %18 : vector<16x48xf32>
    %23 = math.cos %18 : vector<16x48xf32>
    %24 = arith.select %21, %22, %23 : vector<16x48xi1>, vector<16x48xf32>
    %c0_3 = arith.constant 0 : index
    %c0_4 = arith.constant 0 : index
    %25 = vector.load %arg3[%c0_3, %c0_4] : memref<48x32xf32, #tpu.memory_space<vmem>>, vector<48x32xf32>
    %cst = arith.constant dense<0.000000e+00> : vector<16x32xf32>
    %26 = tpu.matmul %24, %25, %cst {dimension_numbers = #tpu.dot_dimension_numbers<[1], [0], [0], [1], [0, 0, 1, 1], [], []>} : vector<16x48xf32>, vector<48x32xf32>, vector<16x32xf32> -> vector<16x32xf32>
    %c0_5 = arith.constant 0 : index
    %c0_6 = arith.constant 0 : index
    %27 = vector.load %arg4[%c0_5, %c0_6] : memref<16x32xf32, #tpu.memory_space<vmem>>, vector<16x32xf32>
    tpu.vector_store %arg4[%c0_5, %c0_6], %26 {strides = array<i32>} : memref<16x32xf32, #tpu.memory_space<vmem>>, vector<16x32xf32>,
    return
  }
  func.func @transform_0(%arg0: i32) -> (i32, i32) {
    %c0_i32 = arith.constant 0 : i32
    %c0_i32_0 = arith.constant 0 : i32
    return %arg0, %c0_i32 : i32, i32
  }
  func.func @transform_1(%arg0: i32) -> (i32, i32) {
    %c0_i32 = arith.constant 0 : i32
    %c0_i32_0 = arith.constant 0 : i32
    %c0_i32_1 = arith.constant 0 : i32
    return %c0_i32, %c0_i32_0 : i32, i32
  }
  func.func @transform_2(%arg0: i32) -> (i32, i32) {
    %c0_i32 = arith.constant 0 : i32
    %c0_i32_0 = arith.constant 0 : i32
    %c0_i32_1 = arith.constant 0 : i32
    return %c0_i32, %c0_i32_0 : i32, i32
  }
  func.func @transform_3(%arg0: i32) -> (i32, i32) {
    %c0_i32 = arith.constant 0 : i32
    %c0_i32_0 = arith.constant 0 : i32
    return %arg0, %c0_i32 : i32, i32
  }
}

</mosaic_0001>

<llo_original>
// kernel: tpu_custom_call.1
$region0: #{tpu_custom_call.1}
  #allocation0 [shape = 'u32[]', space=smem, size = 0x4, offset = 0x4, fixed_abs, tag = 'smem constant byte address 0x4 - core index']
  #allocation1 [shape = 'u32[72,128]{1,0:T(1,128)}', space=vmem, size = 0x9000, scoped, tag = 'internal scratch']
  %s0 = inlined_call_operand.vmem [shape: f32[16,3], index: 0, kind: input, shape index: {}]
  %s1 = inlined_call_operand.vmem [shape: f32[3,48], index: 1, kind: input, shape index: {}]
  %s2 = inlined_call_operand.vmem [shape: f32[48,32], index: 2, kind: input, shape index: {}]
  %s3 = inlined_call_operand.hbm [shape: f32[16,32], index: 3, kind: output, shape index: {}]
  %s4 = sld [smem:[#allocation0]]
  $region22: #{tpu_custom_call.1} parent=0
    _
  %s6 = ssub.s32 1, %s4
  %s7 = scalar_select 0, %s6, %s4
  $region1: #{tpu_custom_call.1} parent=0
    #allocation2 [shape = 'u8[8192]{0}', space=vmem, size = 0x2000, scoped, tag = 'output window, operand 0, single buffered']
    #allocation3 [shape = 's32[1]{0}', space=sflag, size = 0x4, scoped, tag = 'scoped memory for tpu_custom_call.1']
    %8 = vsyncpa [#allocation3], 0
    // Predicated region
    $region2: #{tpu_custom_call.1} parent=1 // pred_check
      _
    $region3: #{tpu_custom_call.1} parent=1 // pred_check_branch
      %10 = sbr.rel (0) target = $region5
    $region4: #{tpu_custom_call.1} parent=1 // pred_region
      _
    $region5: #{tpu_custom_call.1} parent=1 // pred_fallthru
      _
    // Predicated region
    $region6: #{tpu_custom_call.1} parent=1 // pred_check
      _
    $region7: #{tpu_custom_call.1} parent=1 // pred_check_branch
      %12 = sbr.rel (0) target = $region9
    $region8: #{tpu_custom_call.1} parent=1 // pred_region
      _
    $region9: #{tpu_custom_call.1} parent=1 // pred_fallthru
      _
    // Predicated region
    $region10: #{tpu_custom_call.1} parent=1 // pred_check
      _
    $region11: #{tpu_custom_call.1} parent=1 // pred_check_branch
      %14 = sbr.rel (0) target = $region13
    $region12: #{tpu_custom_call.1} parent=1 // pred_region
      _
    $region13: #{tpu_custom_call.1} parent=1 // pred_fallthru
      _
    %v15 = vld [vmem:[%s0] sm:$0xff]
    %v16 = vld [vmem:[%s0 + $0x8] sm:$0xff]
    %v17 = vld [vmem:[%s1] sm:$0x7]
    %19 = vset.pattern.permute.xlu0 0
    %20 = vperm.xlu0 %19, %v15
    %v21 = vpop.permute.xlu0 %20
    %24 = vset.pattern.permute.xlu0 0
    %25 = vperm.xlu0 %24, %v16
    %v26 = vpop.permute.xlu0 %25
    %v28 = vperm.slane %v17, 0
    %v29 = vmul.f32 %v21, %v28
    %v30 = vmul.f32 %v26, %v28
    %31 = vset.pattern.permute.xlu0 1
    %32 = vperm.xlu0 %31, %v15
    %v33 = vpop.permute.xlu0 %32
    %35 = vset.pattern.permute.xlu0 1
    %36 = vperm.xlu0 %35, %v16
    %v37 = vpop.permute.xlu0 %36
    %v39 = vperm.slane %v17, 1
    %v40 = vmul.f32 %v33, %v39
    %v41 = vmul.f32 %v37, %v39
    %v42 = vadd.f32 %v29, %v40
    %v43 = vadd.f32 %v30, %v41
    %44 = vset.pattern.permute.xlu0 2
    %45 = vperm.xlu0 %44, %v15
    %v46 = vpop.permute.xlu0 %45
    %48 = vset.pattern.permute.xlu0 2
    %49 = vperm.xlu0 %48, %v16
    %v50 = vpop.permute.xlu0 %49
    %v52 = vperm.slane %v17, 2
    %v53 = vmul.f32 %v46, %v52
    %v54 = vmul.f32 %v50, %v52
    %v55 = vadd.f32 %v42, %v53
    %v56 = vadd.f32 %v43, %v54
    %v57 = vlaneseq
    %v58 = vand.u32 %v57, 127
    %vm59 = vcmp.lt.s32.totalorder %v58, 24
    %v60 = vand.u32 2147483647, %v55
    %vm61 = vcmp.le.f32.partialorder %v60, 0.7853982
    %vm62 = vcmp.lt.s32.totalorder %v55, 0
    %v63 = vand.u32 %v55, 2139095040
    %v64 = vshrl.u32 %v63, 23
    %v65 = vsub.s32 %v64, 127
    %v66 = vand.u32 2147483647, %v55
    %v67 = vand.u32 %v66, 8388607
    %v68 = vor.u32 %v67, 8388608
    %v69 = vsub.s32 0, %v68
    %v70 = vadd.s32 %v65, 1
    %vm71 = vcmp.gt.s32.totalorder %v70, 0
    %v72 = vsel %vm71, %v70, 0
    %v73 = vshrl.u32 %v72, 5
    %v74 = vand.u32 %v72, 31
    %v75 = vsub.s32 32, %v74
    %v76 = vshrl.u32 683565275, %v75
    %v77 = vshll.u32 683565275, %v74
    %v78 = vshrl.u32 2475754826, %v75
    %v79 = vor.u32 %v77, %v78
    %v80 = vshll.u32 2475754826, %v74
    %v81 = vshrl.u32 2131351028, %v75
    %v82 = vor.u32 %v80, %v81
    %v83 = vshll.u32 2131351028, %v74
    %v84 = vshrl.u32 2102212464, %v75
    %v85 = vor.u32 %v83, %v84
    %v86 = vshll.u32 2102212464, %v74
    %v87 = vshrl.u32 920167782, %v75
    %v88 = vor.u32 %v86, %v87
    %v89 = vshll.u32 920167782, %v74
    %v90 = vshrl.u32 1326507024, %v75
    %v91 = vor.u32 %v89, %v90
    %vm92 = vcmp.lt.s32.totalorder %v73, 1
    %vm93 = vcmp.lt.s32.totalorder %v73, 2
    %vm94 = vcmp.lt.s32.totalorder %v73, 3
    %vm95 = vcmp.lt.s32.totalorder %v73, 4
    %v96 = vsel %vm92, %v76, %v79
    %v97 = vsel %vm95, %v85, 2102212464
    %v98 = vsel %vm94, %v82, %v97
    %v99 = vsel %vm93, %v96, %v98
    %v100 = vsel %vm92, %v79, %v82
    %v101 = vsel %vm95, %v88, 920167782
    %v102 = vsel %vm94, %v85, %v101
    %v103 = vsel %vm93, %v100, %v102
    %v104 = vsel %vm92, %v82, %v85
    %v105 = vsel %vm95, %v91, 1326507024
    %v106 = vsel %vm94, %v88, %v105
    %v107 = vsel %vm93, %v104, %v106
    %v108 = vshll.u32 %v68, 8
    %v109 = vand.u32 %v108, 65535
    %v110 = vshrl.u32 %v108, 16
    %v111 = vand.u32 %v107, 65535
    %v112 = vshrl.u32 %v107, 16
    %v113 = vmul.u32 %v109, %v111
    %v114 = vmul.u32 %v109, %v112
    %v115 = vmul.u32 %v110, %v111
    %v116 = vmul.u32 %v110, %v112
    %v117 = vshll.u32 %v114, 16
    %v118 = vshrl.u32 %v114, 16
    %v119 = vshll.u32 %v115, 16
    %v120 = vshrl.u32 %v115, 16
    %vm121 = vc.u32 %v113, %v117
    %v122 = vsel %vm121, 1, 0
    %v123 = vadd.s32 %v113, %v117
    %v124 = vadd.s32 %v116, %v122
    %vm125 = vc.u32 %v123, %v119
    %v126 = vsel %vm125, 1, 0
    %v127 = vadd.s32 %v123, %v119
    %v128 = vadd.s32 %v124, %v126
    %v129 = vadd.s32 %v128, %v118
    %v130 = vadd.s32 %v129, %v120
    %v131 = vand.u32 %v108, 65535
    %v132 = vshrl.u32 %v108, 16
    %v133 = vand.u32 %v103, 65535
    %v134 = vshrl.u32 %v103, 16
    %v135 = vmul.u32 %v131, %v133
    %v136 = vmul.u32 %v131, %v134
    %v137 = vmul.u32 %v132, %v133
    %v138 = vmul.u32 %v132, %v134
    %v139 = vshll.u32 %v136, 16
    %v140 = vshrl.u32 %v136, 16
    %v141 = vshll.u32 %v137, 16
    %v142 = vshrl.u32 %v137, 16
    %vm143 = vc.u32 %v135, %v139
    %v144 = vsel %vm143, 1, 0
    %v145 = vadd.s32 %v135, %v139
    %v146 = vadd.s32 %v138, %v144
    %vm147 = vc.u32 %v145, %v141
    %v148 = vsel %vm147, 1, 0
    %v149 = vadd.s32 %v145, %v141
    %v150 = vadd.s32 %v146, %v148
    %v151 = vadd.s32 %v150, %v140
    %v152 = vadd.s32 %v151, %v142
    %v153 = vmul.u32 %v108, %v99
    %v154 = vadd.s32 %v130, %v149
    %vm155 = vc.u32 %v130, %v149
    %v156 = vadd.s32 %v152, 1
    %v157 = vsel %vm155, %v156, %v152
    %v158 = vadd.s32 %v153, %v157
    %v159 = vadd.s32 %v158, 536870912
    %v160 = vshrl.u32 %v159, 30
    %v161 = vshll.u32 %v160, 30
    %v162 = vsub.s32 %v158, %v161
    %vm163 = vcmp.lt.s32.totalorder %v162, 0
    %v164 = vsub.s32 0, %v162
    %v165 = vsel %vm163, %v164, %v162
    %v166 = vclz %v165
    %v167 = vsub.s32 %v166, 2
    %vm168 = vcmp.gt.s32.totalorder 0, %v167
    %v169 = vsel %vm168, 0, %v167
    %v170 = vsub.s32 32, %v169
    %v171 = vshll.u32 %v162, %v169
    %v172 = vshrl.u32 %v154, %v170
    %v173 = vor.u32 %v171, %v172
    %v174 = vsub.s32 4294967266, %v169
    %v175 = vadd.s32 %v174, 127
    %v176 = vshll.u32 %v175, 23
    %v177 = vor.u32 4788187, %v176
    %v178 = vand.u32 2147483647, %v177
    %v180 = vcvt.s32.f32 %v173
    %v181 = vmul.f32 %v180, %v178
    %v182 = vxor.u32 %v181, 2147483648
    %v183 = vsel %vm62, %v182, %v181
    %v184 = vsub.s32 4, %v160
    %v185 = vsel %vm62, %v184, %v160
    %v186 = vsel %vm61, %v55, %v183
    %v187 = vsel %vm61, 0, %v185
    %v188 = vmul.f32 %v186, %v186
    %v189 = vmul.f32 %v188, -0.001358992
    %v190 = vadd.f32 %v189, 0.041655596
    %v191 = vmul.f32 %v188, %v190
    %v192 = vadd.f32 %v191, -0.4999988
    %v193 = vmul.f32 %v188, %v192
    %v194 = vadd.f32 1.0, %v193
    %v195 = vmul.f32 %v186, %v186
    %v196 = vmul.f32 %v195, -0.00019511016
    %v197 = vadd.f32 %v196, 0.008332121
    %v198 = vmul.f32 %v195, %v197
    %v199 = vadd.f32 %v198, -0.16666654
    %v200 = vmul.f32 %v195, %v199
    %v201 = vadd.f32 %v200, 1.0
    %v202 = vmul.f32 %v201, %v186
    %vm203 = vweird.f32 %v55
    %v204 = vadd.s32 %v187, 3
    %v205 = vand.u32 %v204, 3
    %vm206 = vcmp.lt.s32.totalorder %v205, 2
    %vm207 = vcmp.eq.s32.totalorder %v205, 0
    %v208 = vxor.u32 %v202, 2147483648
    %v209 = vsel %vm207, %v194, %v208
    %vm210 = vcmp.eq.s32.totalorder %v205, 2
    %v211 = vxor.u32 %v194, 2147483648
    %v212 = vsel %vm210, %v211, %v202
    %v213 = vsel %vm206, %v209, %v212
    %v214 = vsel %vm203, nan, %v213
    %v215 = vand.u32 2147483647, %v56
    %vm216 = vcmp.le.f32.partialorder %v215, 0.7853982
    %vm217 = vcmp.lt.s32.totalorder %v56, 0
    %v218 = vand.u32 %v56, 2139095040
    %v219 = vshrl.u32 %v218, 23
    %v220 = vsub.s32 %v219, 127
    %v221 = vand.u32 2147483647, %v56
    %v222 = vand.u32 %v221, 8388607
    %v223 = vor.u32 %v222, 8388608
    %v224 = vsub.s32 0, %v223
    %v225 = vadd.s32 %v220, 1
    %vm226 = vcmp.gt.s32.totalorder %v225, 0
    %v227 = vsel %vm226, %v225, 0
    %v228 = vshrl.u32 %v227, 5
    %v229 = vand.u32 %v227, 31
    %v230 = vsub.s32 32, %v229
    %v231 = vshrl.u32 683565275, %v230
    %v232 = vshll.u32 683565275, %v229
    %v233 = vshrl.u32 2475754826, %v230
    %v234 = vor.u32 %v232, %v233
    %v235 = vshll.u32 2475754826, %v229
    %v236 = vshrl.u32 2131351028, %v230
    %v237 = vor.u32 %v235, %v236
    %v238 = vshll.u32 2131351028, %v229
    %v239 = vshrl.u32 2102212464, %v230
    %v240 = vor.u32 %v238, %v239
    %v241 = vshll.u32 2102212464, %v229
    %v242 = vshrl.u32 920167782, %v230
    %v243 = vor.u32 %v241, %v242
    %v244 = vshll.u32 920167782, %v229
    %v245 = vshrl.u32 1326507024, %v230
    %v246 = vor.u32 %v244, %v245
    %vm247 = vcmp.lt.s32.totalorder %v228, 1
    %vm248 = vcmp.lt.s32.totalorder %v228, 2
    %vm249 = vcmp.lt.s32.totalorder %v228, 3
    %vm250 = vcmp.lt.s32.totalorder %v228, 4
    %v251 = vsel %vm247, %v231, %v234
    %v252 = vsel %vm250, %v240, 2102212464
    %v253 = vsel %vm249, %v237, %v252
    %v254 = vsel %vm248, %v251, %v253
    %v255 = vsel %vm247, %v234, %v237
    %v256 = vsel %vm250, %v243, 920167782
    %v257 = vsel %vm249, %v240, %v256
    %v258 = vsel %vm248, %v255, %v257
    %v259 = vsel %vm247, %v237, %v240
    %v260 = vsel %vm250, %v246, 1326507024
    %v261 = vsel %vm249, %v243, %v260
    %v262 = vsel %vm248, %v259, %v261
    %v263 = vshll.u32 %v223, 8
    %v264 = vand.u32 %v263, 65535
    %v265 = vshrl.u32 %v263, 16
    %v266 = vand.u32 %v262, 65535
    %v267 = vshrl.u32 %v262, 16
    %v268 = vmul.u32 %v264, %v266
    %v269 = vmul.u32 %v264, %v267
    %v270 = vmul.u32 %v265, %v266
    %v271 = vmul.u32 %v265, %v267
    %v272 = vshll.u32 %v269, 16
    %v273 = vshrl.u32 %v269, 16
    %v274 = vshll.u32 %v270, 16
    %v275 = vshrl.u32 %v270, 16
    %vm276 = vc.u32 %v268, %v272
    %v277 = vsel %vm276, 1, 0
    %v278 = vadd.s32 %v268, %v272
    %v279 = vadd.s32 %v271, %v277
    %vm280 = vc.u32 %v278, %v274
    %v281 = vsel %vm280, 1, 0
    %v282 = vadd.s32 %v278, %v274
    %v283 = vadd.s32 %v279, %v281
    %v284 = vadd.s32 %v283, %v273
    %v285 = vadd.s32 %v284, %v275
    %v286 = vand.u32 %v263, 65535
    %v287 = vshrl.u32 %v263, 16
    %v288 = vand.u32 %v258, 65535
    %v289 = vshrl.u32 %v258, 16
    %v290 = vmul.u32 %v286, %v288
    %v291 = vmul.u32 %v286, %v289
    %v292 = vmul.u32 %v287, %v288
    %v293 = vmul.u32 %v287, %v289
    %v294 = vshll.u32 %v291, 16
    %v295 = vshrl.u32 %v291, 16
    %v296 = vshll.u32 %v292, 16
    %v297 = vshrl.u32 %v292, 16
    %vm298 = vc.u32 %v290, %v294
    %v299 = vsel %vm298, 1, 0
    %v300 = vadd.s32 %v290, %v294
    %v301 = vadd.s32 %v293, %v299
    %vm302 = vc.u32 %v300, %v296
    %v303 = vsel %vm302, 1, 0
    %v304 = vadd.s32 %v300, %v296
    %v305 = vadd.s32 %v301, %v303
    %v306 = vadd.s32 %v305, %v295
    %v307 = vadd.s32 %v306, %v297
    %v308 = vmul.u32 %v263, %v254
    %v309 = vadd.s32 %v285, %v304
    %vm310 = vc.u32 %v285, %v304
    %v311 = vadd.s32 %v307, 1
    %v312 = vsel %vm310, %v311, %v307
    %v313 = vadd.s32 %v308, %v312
    %v314 = vadd.s32 %v313, 536870912
    %v315 = vshrl.u32 %v314, 30
    %v316 = vshll.u32 %v315, 30
    %v317 = vsub.s32 %v313, %v316
    %vm318 = vcmp.lt.s32.totalorder %v317, 0
    %v319 = vsub.s32 0, %v317
    %v320 = vsel %vm318, %v319, %v317
    %v321 = vclz %v320
    %v322 = vsub.s32 %v321, 2
    %vm323 = vcmp.gt.s32.totalorder 0, %v322
    %v324 = vsel %vm323, 0, %v322
    %v325 = vsub.s32 32, %v324
    %v326 = vshll.u32 %v317, %v324
    %v327 = vshrl.u32 %v309, %v325
    %v328 = vor.u32 %v326, %v327
    %v329 = vsub.s32 4294967266, %v324
    %v330 = vadd.s32 %v329, 127
    %v331 = vshll.u32 %v330, 23
    %v332 = vor.u32 4788187, %v331
    %v333 = vand.u32 2147483647, %v332
    %v335 = vcvt.s32.f32 %v328
    %v336 = vmul.f32 %v335, %v333
    %v337 = vxor.u32 %v336, 2147483648
    %v338 = vsel %vm217, %v337, %v336
    %v339 = vsub.s32 4, %v315
    %v340 = vsel %vm217, %v339, %v315
    %v341 = vsel %vm216, %v56, %v338
    %v342 = vsel %vm216, 0, %v340
    %v343 = vmul.f32 %v341, %v341
    %v344 = vmul.f32 %v343, -0.001358992
    %v345 = vadd.f32 %v344, 0.041655596
    %v346 = vmul.f32 %v343, %v345
    %v347 = vadd.f32 %v346, -0.4999988
    %v348 = vmul.f32 %v343, %v347
    %v349 = vadd.f32 1.0, %v348
    %v350 = vmul.f32 %v341, %v341
    %v351 = vmul.f32 %v350, -0.00019511016
    %v352 = vadd.f32 %v351, 0.008332121
    %v353 = vmul.f32 %v350, %v352
    %v354 = vadd.f32 %v353, -0.16666654
    %v355 = vmul.f32 %v350, %v354
    %v356 = vadd.f32 %v355, 1.0
    %v357 = vmul.f32 %v356, %v341
    %vm358 = vweird.f32 %v56
    %v359 = vadd.s32 %v342, 3
    %v360 = vand.u32 %v359, 3
    %vm361 = vcmp.lt.s32.totalorder %v360, 2
    %vm362 = vcmp.eq.s32.totalorder %v360, 0
    %v363 = vxor.u32 %v357, 2147483648
    %v364 = vsel %vm362, %v349, %v363
    %vm365 = vcmp.eq.s32.totalorder %v360, 2
    %v366 = vxor.u32 %v349, 2147483648
    %v367 = vsel %vm365, %v366, %v357
    %v368 = vsel %vm361, %v364, %v367
    %v369 = vsel %vm358, nan, %v368
    %v370 = vand.u32 2147483647, %v55
    %vm371 = vcmp.le.f32.partialorder %v370, 0.7853982
    %vm372 = vcmp.lt.s32.totalorder %v55, 0
    %v373 = vand.u32 %v55, 2139095040
    %v374 = vshrl.u32 %v373, 23
    %v375 = vsub.s32 %v374, 127
    %v376 = vand.u32 2147483647, %v55
    %v377 = vand.u32 %v376, 8388607
    %v378 = vor.u32 %v377, 8388608
    %v379 = vsub.s32 0, %v378
    %v380 = vadd.s32 %v375, 1
    %vm381 = vcmp.gt.s32.totalorder %v380, 0
    %v382 = vsel %vm381, %v380, 0
    %v383 = vshrl.u32 %v382, 5
    %v384 = vand.u32 %v382, 31
    %v385 = vsub.s32 32, %v384
    %v386 = vshrl.u32 683565275, %v385
    %v387 = vshll.u32 683565275, %v384
    %v388 = vshrl.u32 2475754826, %v385
    %v389 = vor.u32 %v387, %v388
    %v390 = vshll.u32 2475754826, %v384
    %v391 = vshrl.u32 2131351028, %v385
    %v392 = vor.u32 %v390, %v391
    %v393 = vshll.u32 2131351028, %v384
    %v394 = vshrl.u32 2102212464, %v385
    %v395 = vor.u32 %v393, %v394
    %v396 = vshll.u32 2102212464, %v384
    %v397 = vshrl.u32 920167782, %v385
    %v398 = vor.u32 %v396, %v397
    %v399 = vshll.u32 920167782, %v384
    %v400 = vshrl.u32 1326507024, %v385
    %v401 = vor.u32 %v399, %v400
    %vm402 = vcmp.lt.s32.totalorder %v383, 1
    %vm403 = vcmp.lt.s32.totalorder %v383, 2
    %vm404 = vcmp.lt.s32.totalorder %v383, 3
    %vm405 = vcmp.lt.s32.totalorder %v383, 4
    %v406 = vsel %vm402, %v386, %v389
    %v407 = vsel %vm405, %v395, 2102212464
    %v408 = vsel %vm404, %v392, %v407
    %v409 = vsel %vm403, %v406, %v408
    %v410 = vsel %vm402, %v389, %v392
    %v411 = vsel %vm405, %v398, 920167782
    %v412 = vsel %vm404, %v395, %v411
    %v413 = vsel %vm403, %v410, %v412
    %v414 = vsel %vm402, %v392, %v395
    %v415 = vsel %vm405, %v401, 1326507024
    %v416 = vsel %vm404, %v398, %v415
    %v417 = vsel %vm403, %v414, %v416
    %v418 = vshll.u32 %v378, 8
    %v419 = vand.u32 %v418, 65535
    %v420 = vshrl.u32 %v418, 16
    %v421 = vand.u32 %v417, 65535
    %v422 = vshrl.u32 %v417, 16
    %v423 = vmul.u32 %v419, %v421
    %v424 = vmul.u32 %v419, %v422
    %v425 = vmul.u32 %v420, %v421
    %v426 = vmul.u32 %v420, %v422
    %v427 = vshll.u32 %v424, 16
    %v428 = vshrl.u32 %v424, 16
    %v429 = vshll.u32 %v425, 16
    %v430 = vshrl.u32 %v425, 16
    %vm431 = vc.u32 %v423, %v427
    %v432 = vsel %vm431, 1, 0
    %v433 = vadd.s32 %v423, %v427
    %v434 = vadd.s32 %v426, %v432
    %vm435 = vc.u32 %v433, %v429
    %v436 = vsel %vm435, 1, 0
    %v437 = vadd.s32 %v433, %v429
    %v438 = vadd.s32 %v434, %v436
    %v439 = vadd.s32 %v438, %v428
    %v440 = vadd.s32 %v439, %v430
    %v441 = vand.u32 %v418, 65535
    %v442 = vshrl.u32 %v418, 16
    %v443 = vand.u32 %v413, 65535
    %v444 = vshrl.u32 %v413, 16
    %v445 = vmul.u32 %v441, %v443
    %v446 = vmul.u32 %v441, %v444
    %v447 = vmul.u32 %v442, %v443
    %v448 = vmul.u32 %v442, %v444
    %v449 = vshll.u32 %v446, 16
    %v450 = vshrl.u32 %v446, 16
    %v451 = vshll.u32 %v447, 16
    %v452 = vshrl.u32 %v447, 16
    %vm453 = vc.u32 %v445, %v449
    %v454 = vsel %vm453, 1, 0
    %v455 = vadd.s32 %v445, %v449
    %v456 = vadd.s32 %v448, %v454
    %vm457 = vc.u32 %v455, %v451
    %v458 = vsel %vm457, 1, 0
    %v459 = vadd.s32 %v455, %v451
    %v460 = vadd.s32 %v456, %v458
    %v461 = vadd.s32 %v460, %v450
    %v462 = vadd.s32 %v461, %v452
    %v463 = vmul.u32 %v418, %v409
    %v464 = vadd.s32 %v440, %v459
    %vm465 = vc.u32 %v440, %v459
    %v466 = vadd.s32 %v462, 1
    %v467 = vsel %vm465, %v466, %v462
    %v468 = vadd.s32 %v463, %v467
    %v469 = vadd.s32 %v468, 536870912
    %v470 = vshrl.u32 %v469, 30
    %v471 = vshll.u32 %v470, 30
    %v472 = vsub.s32 %v468, %v471
    %vm473 = vcmp.lt.s32.totalorder %v472, 0
    %v474 = vsub.s32 0, %v472
    %v475 = vsel %vm473, %v474, %v472
    %v476 = vclz %v475
    %v477 = vsub.s32 %v476, 2
    %vm478 = vcmp.gt.s32.totalorder 0, %v477
    %v479 = vsel %vm478, 0, %v477
    %v480 = vsub.s32 32, %v479
    %v481 = vshll.u32 %v472, %v479
    %v482 = vshrl.u32 %v464, %v480
    %v483 = vor.u32 %v481, %v482
    %v484 = vsub.s32 4294967266, %v479
    %v485 = vadd.s32 %v484, 127
    %v486 = vshll.u32 %v485, 23
    %v487 = vor.u32 4788187, %v486
    %v488 = vand.u32 2147483647, %v487
    %v490 = vcvt.s32.f32 %v483
    %v491 = vmul.f32 %v490, %v488
    %v492 = vxor.u32 %v491, 2147483648
    %v493 = vsel %vm372, %v492, %v491
    %v494 = vsub.s32 4, %v470
    %v495 = vsel %vm372, %v494, %v470
    %v496 = vsel %vm371, %v55, %v493
    %v497 = vsel %vm371, 0, %v495
    %v498 = vmul.f32 %v496, %v496
    %v499 = vmul.f32 %v498, -0.001358992
    %v500 = vadd.f32 %v499, 0.041655596
    %v501 = vmul.f32 %v498, %v500
    %v502 = vadd.f32 %v501, -0.4999988
    %v503 = vmul.f32 %v498, %v502
    %v504 = vadd.f32 1.0, %v503
    %v505 = vmul.f32 %v496, %v496
    %v506 = vmul.f32 %v505, -0.00019511016
    %v507 = vadd.f32 %v506, 0.008332121
    %v508 = vmul.f32 %v505, %v507
    %v509 = vadd.f32 %v508, -0.16666654
    %v510 = vmul.f32 %v505, %v509
    %v511 = vadd.f32 %v510, 1.0
    %v512 = vmul.f32 %v511, %v496
    %vm513 = vweird.f32 %v55
    %v514 = vand.u32 %v497, 3
    %vm515 = vcmp.lt.s32.totalorder %v514, 2
    %vm516 = vcmp.eq.s32.totalorder %v514, 0
    %v517 = vxor.u32 %v512, 2147483648
    %v518 = vsel %vm516, %v504, %v517
    %vm519 = vcmp.eq.s32.totalorder %v514, 2
    %v520 = vxor.u32 %v504, 2147483648
    %v521 = vsel %vm519, %v520, %v512
    %v522 = vsel %vm515, %v518, %v521
    %v523 = vsel %vm513, nan, %v522
    %v524 = vand.u32 2147483647, %v56
    %vm525 = vcmp.le.f32.partialorder %v524, 0.7853982
    %vm526 = vcmp.lt.s32.totalorder %v56, 0
    %v527 = vand.u32 %v56, 2139095040
    %v528 = vshrl.u32 %v527, 23
    %v529 = vsub.s32 %v528, 127
    %v530 = vand.u32 2147483647, %v56
    %v531 = vand.u32 %v530, 8388607
    %v532 = vor.u32 %v531, 8388608
    %v533 = vsub.s32 0, %v532
    %v534 = vadd.s32 %v529, 1
    %vm535 = vcmp.gt.s32.totalorder %v534, 0
    %v536 = vsel %vm535, %v534, 0
    %v537 = vshrl.u32 %v536, 5
    %v538 = vand.u32 %v536, 31
    %v539 = vsub.s32 32, %v538
    %v540 = vshrl.u32 683565275, %v539
    %v541 = vshll.u32 683565275, %v538
    %v542 = vshrl.u32 2475754826, %v539
    %v543 = vor.u32 %v541, %v542
    %v544 = vshll.u32 2475754826, %v538
    %v545 = vshrl.u32 2131351028, %v539
    %v546 = vor.u32 %v544, %v545
    %v547 = vshll.u32 2131351028, %v538
    %v548 = vshrl.u32 2102212464, %v539
    %v549 = vor.u32 %v547, %v548
    %v550 = vshll.u32 2102212464, %v538
    %v551 = vshrl.u32 920167782, %v539
    %v552 = vor.u32 %v550, %v551
    %v553 = vshll.u32 920167782, %v538
    %v554 = vshrl.u32 1326507024, %v539
    %v555 = vor.u32 %v553, %v554
    %vm556 = vcmp.lt.s32.totalorder %v537, 1
    %vm557 = vcmp.lt.s32.totalorder %v537, 2
    %vm558 = vcmp.lt.s32.totalorder %v537, 3
    %vm559 = vcmp.lt.s32.totalorder %v537, 4
    %v560 = vsel %vm556, %v540, %v543
    %v561 = vsel %vm559, %v549, 2102212464
    %v562 = vsel %vm558, %v546, %v561
    %v563 = vsel %vm557, %v560, %v562
    %v564 = vsel %vm556, %v543, %v546
    %v565 = vsel %vm559, %v552, 920167782
    %v566 = vsel %vm558, %v549, %v565
    %v567 = vsel %vm557, %v564, %v566
    %v568 = vsel %vm556, %v546, %v549
    %v569 = vsel %vm559, %v555, 1326507024
    %v570 = vsel %vm558, %v552, %v569
    %v571 = vsel %vm557, %v568, %v570
    %v572 = vshll.u32 %v532, 8
    %v573 = vand.u32 %v572, 65535
    %v574 = vshrl.u32 %v572, 16
    %v575 = vand.u32 %v571, 65535
    %v576 = vshrl.u32 %v571, 16
    %v577 = vmul.u32 %v573, %v575
    %v578 = vmul.u32 %v573, %v576
    %v579 = vmul.u32 %v574, %v575
    %v580 = vmul.u32 %v574, %v576
    %v581 = vshll.u32 %v578, 16
    %v582 = vshrl.u32 %v578, 16
    %v583 = vshll.u32 %v579, 16
    %v584 = vshrl.u32 %v579, 16
    %vm585 = vc.u32 %v577, %v581
    %v586 = vsel %vm585, 1, 0
    %v587 = vadd.s32 %v577, %v581
    %v588 = vadd.s32 %v580, %v586
    %vm589 = vc.u32 %v587, %v583
    %v590 = vsel %vm589, 1, 0
    %v591 = vadd.s32 %v587, %v583
    %v592 = vadd.s32 %v588, %v590
    %v593 = vadd.s32 %v592, %v582
    %v594 = vadd.s32 %v593, %v584
    %v595 = vand.u32 %v572, 65535
    %v596 = vshrl.u32 %v572, 16
    %v597 = vand.u32 %v567, 65535
    %v598 = vshrl.u32 %v567, 16
    %v599 = vmul.u32 %v595, %v597
    %v600 = vmul.u32 %v595, %v598
    %v601 = vmul.u32 %v596, %v597
    %v602 = vmul.u32 %v596, %v598
    %v603 = vshll.u32 %v600, 16
    %v604 = vshrl.u32 %v600, 16
    %v605 = vshll.u32 %v601, 16
    %v606 = vshrl.u32 %v601, 16
    %vm607 = vc.u32 %v599, %v603
    %v608 = vsel %vm607, 1, 0
    %v609 = vadd.s32 %v599, %v603
    %v610 = vadd.s32 %v602, %v608
    %vm611 = vc.u32 %v609, %v605
    %v612 = vsel %vm611, 1, 0
    %v613 = vadd.s32 %v609, %v605
    %v614 = vadd.s32 %v610, %v612
    %v615 = vadd.s32 %v614, %v604
    %v616 = vadd.s32 %v615, %v606
    %v617 = vmul.u32 %v572, %v563
    %v618 = vadd.s32 %v594, %v613
    %vm619 = vc.u32 %v594, %v613
    %v620 = vadd.s32 %v616, 1
    %v621 = vsel %vm619, %v620, %v616
    %v622 = vadd.s32 %v617, %v621
    %v623 = vadd.s32 %v622, 536870912
    %v624 = vshrl.u32 %v623, 30
    %v625 = vshll.u32 %v624, 30
    %v626 = vsub.s32 %v622, %v625
    %vm627 = vcmp.lt.s32.totalorder %v626, 0
    %v628 = vsub.s32 0, %v626
    %v629 = vsel %vm627, %v628, %v626
    %v630 = vclz %v629
    %v631 = vsub.s32 %v630, 2
    %vm632 = vcmp.gt.s32.totalorder 0, %v631
    %v633 = vsel %vm632, 0, %v631
    %v634 = vsub.s32 32, %v633
    %v635 = vshll.u32 %v626, %v633
    %v636 = vshrl.u32 %v618, %v634
    %v637 = vor.u32 %v635, %v636
    %v638 = vsub.s32 4294967266, %v633
    %v639 = vadd.s32 %v638, 127
    %v640 = vshll.u32 %v639, 23
    %v641 = vor.u32 4788187, %v640
    %v642 = vand.u32 2147483647, %v641
    %v644 = vcvt.s32.f32 %v637
    %v645 = vmul.f32 %v644, %v642
    %v646 = vxor.u32 %v645, 2147483648
    %v647 = vsel %vm526, %v646, %v645
    %v648 = vsub.s32 4, %v624
    %v649 = vsel %vm526, %v648, %v624
    %v650 = vsel %vm525, %v56, %v647
    %v651 = vsel %vm525, 0, %v649
    %v652 = vmul.f32 %v650, %v650
    %v653 = vmul.f32 %v652, -0.001358992
    %v654 = vadd.f32 %v653, 0.041655596
    %v655 = vmul.f32 %v652, %v654
    %v656 = vadd.f32 %v655, -0.4999988
    %v657 = vmul.f32 %v652, %v656
    %v658 = vadd.f32 1.0, %v657
    %v659 = vmul.f32 %v650, %v650
    %v660 = vmul.f32 %v659, -0.00019511016
    %v661 = vadd.f32 %v660, 0.008332121
    %v662 = vmul.f32 %v659, %v661
    %v663 = vadd.f32 %v662, -0.16666654
    %v664 = vmul.f32 %v659, %v663
    %v665 = vadd.f32 %v664, 1.0
    %v666 = vmul.f32 %v665, %v650
    %vm667 = vweird.f32 %v56
    %v668 = vand.u32 %v651, 3
    %vm669 = vcmp.lt.s32.totalorder %v668, 2
    %vm670 = vcmp.eq.s32.totalorder %v668, 0
    %v671 = vxor.u32 %v666, 2147483648
    %v672 = vsel %vm670, %v658, %v671
    %vm673 = vcmp.eq.s32.totalorder %v668, 2
    %v674 = vxor.u32 %v658, 2147483648
    %v675 = vsel %vm673, %v674, %v666
    %v676 = vsel %vm669, %v672, %v675
    %v677 = vsel %vm667, nan, %v676
    %v678 = vsel %vm59, %v214, %v523
    %v679 = vsel %vm59, %v369, %v677
    %v680 = vld [vmem:[%s2] sm:$0xff]
    %v681 = vld [vmem:[%s2 + $0x8] sm:$0xff]
    %v682 = vld [vmem:[%s2 + $0x10] sm:$0xff]
    %v683 = vld [vmem:[%s2 + $0x18] sm:$0xff]
    %v684 = vld [vmem:[%s2 + $0x20] sm:$0xff]
    %v685 = vld [vmem:[%s2 + $0x28] sm:$0xff]
    %vm686 = vcmask 392192
    %v688 = vsel %vm686, %v678, 0
    %v691 = vsel %vm686, %v679, 0
    %693 = vmatpush.msra.mxu0 0.0
    %694 = vmatpush.msra.mxu0 0.0
    %695 = vmatpush.msra.mxu0 0.0
    %696 = vmatpush.msra.mxu0 0.0
    %697 = vmatpush.msra.mxu0 0.0
    %698 = vmatpush.msra.mxu0 0.0
    %699 = vmatpush.msra.mxu0 0.0
    %700 = vmatpush.msra.mxu0 0.0
    %701 = vmatpush.msra.mxu0 0.0
    %702 = vmatpush.msra.mxu0 0.0
    %703 = vmatpush.msra.mxu0 %v685
    %704 = vmatpush.msra.mxu0 %v684
    %705 = vmatpush.msra.mxu0 %v683
    %706 = vmatpush.msra.mxu0 %v682
    %707 = vmatpush.msra.mxu0 %v681
    %708 = vmatpush.msra.mxu0 %v680
    %709 = vmatmul.f32.gmra.mxu0 %v688
    %v710 = vpop.f32.mrf.mxu0
    %v711 = vadd.f32 0.0, %v710
    %712 = vmatmul.f32.gmra.mxu0 %v691
    %v713 = vpop.f32.mrf.mxu0
    %v714 = vadd.f32 0.0, %v713
    %715 = vdwg.mxu0
    %vm716 = vcmask 261120
    %717 = vst.msk [vmem:[#allocation2] sm:$0xff] %vm716, %v711
    %718 = vst.msk [vmem:[#allocation2 + $0x8] sm:$0xff] %vm716, %v714
    // Predicated region
    $region14: #{tpu_custom_call.1} parent=1 // pred_check
      _
    $region15: #{tpu_custom_call.1} parent=1 // pred_check_branch
      %720 = sbr.rel (0) target = $region17
    $region16: #{tpu_custom_call.1} parent=1 // pred_region
      %722 = vsyncadd [#allocation3], 0
      %s723 = sshll.u32 [#allocation2], 4
      %s724 = int_to_ptr.vmem [resolvable:$true] %s723
      %s725 = sshll.u32 %s3, 4
      %s726 = int_to_ptr.hbm [resolvable:$true] %s725
      %731 = dma.vmem_to_hbm [thread:$0]  %s724, 256, %s726, [#allocation3], 128, 128, 8
    $region17: #{tpu_custom_call.1} parent=1 // pred_fallthru
      _
    // Predicated region
    $region18: #{tpu_custom_call.1} parent=1 // pred_check
      _
    $region19: #{tpu_custom_call.1} parent=1 // pred_check_branch
      %733 = sbr.rel (0) target = $region21
    $region20: #{tpu_custom_call.1} parent=1 // pred_region
      %735 = dma.done [#allocation3], 256
    $region21: #{tpu_custom_call.1} parent=1 // pred_fallthru
      _
    %736 = vsyncpa [#allocation3], 1

</llo_original>
